<compile_context>
chip_gen: v5e
topology: v5e:2x2
jax: 0.10.0
libtpu: 0.0.40
codegen_flags: <defaults>
</compile_context>

<pallas_src>
import functools

import jax
import jax.numpy as jnp
from jax.experimental import pallas as pl
from jax.experimental.pallas import tpu as pltpu

LANE = 128


def _round_kernel(x_ref, o_ref):
    # Elementwise round-half-to-even on the full VMEM tile (VPU); the kernel is
    # HBM-bandwidth bound, so the body stays a single full-tile load/store.
    o_ref[...] = jnp.round(x_ref[...])


def _cdiv(a: int, b: int) -> int:
    return -(-a // b)


def _sublane_multiple(dtype) -> int:
    # Native tiling: f32 -> (8,128), bf16/f16 -> (16,128), int8/fp8 -> (32,128).
    itemsize = jnp.dtype(dtype).itemsize
    if itemsize >= 4:
        return 8
    if itemsize == 2:
        return 16
    return 32


@functools.lru_cache(maxsize=1)
def _device_kind() -> str:
    try:
        return str(getattr(jax.devices()[0], "device_kind", "")).lower()
    except Exception:  # pragma: no cover - detection failure falls back to safe defaults
        return ""


def _target_tile_bytes(kind: str) -> int:
    # v5e: 16 MiB default scoped VMEM -> keep 2 MiB tiles (4x2 MiB double-buffered),
    #      per-step overhead already <7% at ~820 GB/s.
    # v6e: 4 MiB tiles (16 MiB double-buffered, well under the 32 MiB default).
    # v7x: 4 MiB tiles cut the fixed ~0.35 us/step overhead to <10% at ~3.2 TB/s and
    #      stay safely under the 32 MiB default scoped limit without raising
    #      vmem_limit_bytes.
    if "v5" in kind:
        return 2 << 20
    if "v6" in kind:
        return 4 << 20
    if "v7" in kind:
        return 4 << 20
    return 2 << 20


def _multi_tensorcore(kind: str) -> bool:
    # Only v7x has 2 TensorCores per chip; elsewhere the grid is a serial loop and
    # splitting a single-tile problem into two blocks is pure overhead.
    return "v7" in kind


def _choose_cols(n: int, sub: int) -> int:
    # Divisor-aware lane width: widest of {1024, 512, 256} that both divides n
    # (so the zero-copy path applies) and is small relative to n; else 128.
    for cand in (8 * LANE, 4 * LANE, 2 * LANE):
        if n % cand == 0 and n >= cand * sub * 2:
            return cand
    return LANE


@jax.jit
def _round_impl(x: jax.Array) -> jax.Array:
    orig_shape = x.shape
    dtype = x.dtype
    n = x.size
    if n == 0:
        return x

    itemsize = jnp.dtype(dtype).itemsize
    sub = _sublane_multiple(dtype)
    kind = _device_kind()

    # ---- lane-dense 2-D layout (rows, cols) --------------------------------
    cols = _choose_cols(n, sub)
    rows = _cdiv(n, cols)
    n_lane_padded = rows * cols  # == n whenever cols divides n (zero-copy path)

    # ---- tile size -----------------------------------------------------------
    target_tile_bytes = _target_tile_bytes(kind)
    max_tile_rows = max(sub, (target_tile_bytes // (cols * itemsize)) // sub * sub)

    if rows <= max_tile_rows:
        if _multi_tensorcore(kind) and rows >= 2 * sub:
            # Split into >=2 blocks only where the parallel grid can actually
            # shard across v7x's two TensorCores.
            tile_rows = _cdiv(_cdiv(rows, 2), sub) * sub
        else:
            # Single block covering the full slab: block_shape equals the full
            # array dims, so no row alignment or padding is needed.
            tile_rows = rows
    else:
        tile_rows = max_tile_rows

    grid = (_cdiv(rows, tile_rows),)

    # ---- ragged-tail fallback (only when cols == 128 and n % 128 != 0) ------
    x_flat = x.reshape(-1)
    if n_lane_padded != n:
        # Pad only to the next 128-lane multiple (not to a tile multiple); the pad
        # and the final slice live inside this same jit so dispatch cost is hidden.
        # TODO(synk): handle the ragged tail in-kernel (scalar-prefetch n + masked
        # pltpu.store on the last block) to remove these extra HBM passes entirely.
        x_flat = jnp.pad(x_flat, (0, n_lane_padded - n))
    x2d = x_flat.reshape(rows, cols)

    # Pallas masks the partial last block when rows % tile_rows != 0, so no
    # host-side row padding / output slicing is needed on the lane-aligned path.
    out2d = pl.pallas_call(
        _round_kernel,
        out_shape=jax.ShapeDtypeStruct((rows, cols), dtype),
        grid_spec=pltpu.PrefetchScalarGridSpec(
            num_scalar_prefetch=0,
            grid=grid,
            in_specs=[pl.BlockSpec((tile_rows, cols), lambda i: (i, 0))],
            out_specs=pl.BlockSpec((tile_rows, cols), lambda i: (i, 0)),
        ),
        compiler_params=pltpu.CompilerParams(
            dimension_semantics=("parallel",),
        ),
        # input_output_aliases={0: 0} would halve the HBM footprint, but it is only
        # a win when callers actually donate x; otherwise XLA inserts a defensive
        # copy, so it is intentionally left off here.
    )(x2d)

    out_flat = out2d.reshape(-1)
    if n_lane_padded != n:
        out_flat = out_flat[:n]
    return out_flat.reshape(orig_shape)


# Straight-through estimator: forward = round(x), backward = identity,
# matching the PyTorch RoundingFunction autograd semantics.
@jax.custom_vjp
def round_layer(x: jax.Array) -> jax.Array:
    return _round_impl(x)


def _round_fwd(x):
    return _round_impl(x), None


def _round_bwd(_, g):
    return (g,)


round_layer.defvjp(_round_fwd, _round_bwd)


if __name__ == "__main__":
    key = jax.random.PRNGKey(0)

    # Small NCHW input consistent with a conv-net feature map.
    x = jax.random.normal(key, (2, 4, 16, 16), dtype=jnp.float32) * 3.0
    y = jax.block_until_ready(round_layer(x))
    assert y.shape == x.shape and y.dtype == x.dtype
    assert bool(jnp.all(y == jnp.round(x)))

    # Lane-aligned but not 8-row-aligned: exercises the zero-copy full-block path.
    x1 = jax.random.normal(jax.random.PRNGKey(2), (5, 128), dtype=jnp.float32) * 4.0
    y1 = jax.block_until_ready(round_layer(x1))
    assert bool(jnp.all(y1 == jnp.round(x1)))

    # Ragged size (not a multiple of 128): exercises the minimal-pad fallback path.
    x2 = jax.random.normal(jax.random.PRNGKey(1), (3, 5, 7), dtype=jnp.float32) * 2.0
    y2 = jax.block_until_ready(round_layer(x2))
    assert bool(jnp.all(y2 == jnp.round(x2)))

    # bf16 input: exercises the (16,128) sublane-packing path.
    x3 = (jax.random.normal(jax.random.PRNGKey(3), (4, 32, 32), dtype=jnp.float32) * 3.0
          ).astype(jnp.bfloat16)
    y3 = jax.block_until_ready(round_layer(x3))
    assert y3.dtype == jnp.bfloat16
    assert bool(jnp.all(y3 == jnp.round(x3)))

    # Straight-through backward: gradient of sum(round(x)) must be all ones.
    g = jax.block_until_ready(jax.grad(lambda v: jnp.sum(round_layer(v)))(x))
    assert bool(jnp.all(g == 1.0))

    print("KERNEL_OK")
</pallas_src>

<mosaic_0001>
module attributes {stable_mosaic.version = 11 : i64} {
  func.func @_round_kernel(%arg0: i32, %arg1: memref<16x128xf32, #tpu.memory_space<vmem>>, %arg2: memref<16x128xf32, #tpu.memory_space<vmem>>) attributes {dimension_semantics = [#tpu.dimension_semantics<parallel>], iteration_bounds = array<i64: 1>, scalar_prefetch = 0 : i64, scratch_operands = 0 : i64, tpu.core_type = #tpu.core_type<tc>, window_params = [{transform_indices = @transform_0, window_bounds = array<i64: 16, 128>}, {transform_indices = @transform_1, window_bounds = array<i64: 16, 128>}]} {
    %c0 = arith.constant 0 : index
    %c0_0 = arith.constant 0 : index
    %0 = vector.load %arg1[%c0, %c0_0] : memref<16x128xf32, #tpu.memory_space<vmem>>, vector<16x128xf32>
    %1 = math.roundeven %0 : vector<16x128xf32>
    %c0_1 = arith.constant 0 : index
    %c0_2 = arith.constant 0 : index
    %2 = vector.load %arg2[%c0_1, %c0_2] : memref<16x128xf32, #tpu.memory_space<vmem>>, vector<16x128xf32>
    tpu.vector_store %arg2[%c0_1, %c0_2], %1 {strides = array<i32>} : memref<16x128xf32, #tpu.memory_space<vmem>>, vector<16x128xf32>,
    return
  }
  func.func @transform_0(%arg0: i32) -> (i32, i32) {
    %c0_i32 = arith.constant 0 : i32
    %c0_i32_0 = arith.constant 0 : i32
    return %arg0, %c0_i32 : i32, i32
  }
  func.func @transform_1(%arg0: i32) -> (i32, i32) {
    %c0_i32 = arith.constant 0 : i32
    %c0_i32_0 = arith.constant 0 : i32
    return %arg0, %c0_i32 : i32, i32
  }
}

</mosaic_0001>

<llo_original>
// kernel: _round_impl.1
$region0: #{_round_impl.1}
  #allocation0 [shape = 'u32[]', space=smem, size = 0x4, offset = 0x4, fixed_abs, tag = 'smem constant byte address 0x4 - core index']
  #allocation1 [shape = 'u32[72,128]{1,0:T(1,128)}', space=vmem, size = 0x9000, scoped, tag = 'internal scratch']
  %s0 = inlined_call_operand.vmem [shape: f32[16,128], index: 0, kind: input, shape index: {}]
  %s1 = inlined_call_operand.vmem [shape: f32[16,128], index: 1, kind: output, shape index: {}]
  %s2 = sld [smem:[#allocation0]]
  $region14: #{_round_impl.1} parent=0
    _
  %s4 = ssub.s32 1, %s2
  %s5 = scalar_select 0, %s4, %s2
  // Predicated region
  $region2: #{_round_impl.1} parent=0 // pred_check
    _
  $region3: #{_round_impl.1} parent=0 // pred_check_branch
    %7 = sbr.rel (0) target = $region5
  $region4: #{_round_impl.1} parent=0 // pred_region
    _
  $region5: #{_round_impl.1} parent=0 // pred_fallthru
    _
  %v8 = vld [vmem:[%s0] sm:$0xff]
  %v9 = vld [vmem:[%s0 + $0x8] sm:$0xff]
  %v10 = vround.ne.pseudo %v8
  %v11 = vround.ne.pseudo %v9
  %12 = vst [vmem:[%s1] sm:$0xff] %v10
  %13 = vst [vmem:[%s1 + $0x8] sm:$0xff] %v11
  // Predicated region
  $region6: #{_round_impl.1} parent=0 // pred_check
    _
  $region7: #{_round_impl.1} parent=0 // pred_check_branch
    %15 = sbr.rel (0) target = $region9
  $region8: #{_round_impl.1} parent=0 // pred_region
    _
  $region9: #{_round_impl.1} parent=0 // pred_fallthru
    _
  // Predicated region
  $region10: #{_round_impl.1} parent=0 // pred_check
    _
  $region11: #{_round_impl.1} parent=0 // pred_check_branch
    %17 = sbr.rel (0) target = $region13
  $region12: #{_round_impl.1} parent=0 // pred_region
    _
  $region13: #{_round_impl.1} parent=0 // pred_fallthru
    _

</llo_original>
